<compile_context>
chip_gen: v7x
topology: tpu7x:2x2x1
jax: 0.10.0
libtpu: 0.0.40
codegen_flags: <defaults>
</compile_context>

<pallas_src>
import jax
import jax.numpy as jnp
from jax import lax
from jax.experimental import pallas as pl
from jax.experimental.pallas import tpu as pltpu

_NEG_SLOPE = 0.01  # nn.LeakyReLU() default negative_slope


def _leaky_relu(v):
    # 2 VALU ops (mul + max) instead of cmp + select + mul.
    return jnp.maximum(v, _NEG_SLOPE * v)


def _round_up(n, m):
    return ((n + m - 1) // m) * m


def temperature_nn_kernel(x_ref, w1_ref, b1_ref, w2_ref, b2_ref,
                          w3_ref, b3_ref, w4_ref, b4_ref, o_ref):
    # x: (TB, d_in) f32 -> bf16 in-kernel; weights bf16; biases f32; f32 accumulation.
    x = x_ref[...].astype(jnp.bfloat16)

    # fc1 -> LeakyReLU   (dropout p=0.3: identity in eval mode)
    h = jnp.dot(x, w1_ref[...], preferred_element_type=jnp.float32) + b1_ref[...]
    h = _leaky_relu(h)

    # fc2 -> LeakyReLU   (dropout p=0.3: identity in eval mode)
    h = jnp.dot(h.astype(jnp.bfloat16), w2_ref[...],
                preferred_element_type=jnp.float32) + b2_ref[...]
    h = _leaky_relu(h)

    # fc3 -> LeakyReLU
    h = jnp.dot(h.astype(jnp.bfloat16), w3_ref[...],
                preferred_element_type=jnp.float32) + b3_ref[...]
    h = _leaky_relu(h)

    # fc4 (out_features == 1): contract the 128-wide hidden dim with the batch landing
    # in the lane dim -> lane-dense (1, TB) output row, no broadcast writeback.
    # w4 is zero-padded to 8 sublane rows (row 0 holds the real weights).
    rows = lax.dot_general(
        w4_ref[...], h.astype(jnp.bfloat16),
        dimension_numbers=(((1,), (1,)), ((), ())),
        preferred_element_type=jnp.float32)              # (8, TB)
    o_ref[...] = rows[0:1, :] + b4_ref[...]              # (1, TB) + (1, 1) broadcast


def _choose_batch_tile(batch, block_batch):
    """Batch tile: multiple of 16 (bf16 sublane packing); multiple of 256 once large
    (MXU M-occupancy on v6e/v7x); capped so big batches yield >= 2 grid steps so the
    'parallel' batch axis can shard across both v7x TensorCores."""
    tb = _round_up(min(batch, block_batch), 16)
    if tb >= 256:
        tb = _round_up(tb, 256)
        half = _round_up((batch + 1) // 2, 256)
        tb = max(256, min(tb, half))
    return tb


def temperature_nn_forward(x, params, *, block_batch=1024):
    """x: (B, input_dim) float32. params: w1..w4 in (in_features, out_features) layout,
    b1..b4 as (1, out_features)."""
    B, d_in = x.shape

    TB = _choose_batch_tile(B, block_batch)
    Bp = _round_up(B, TB)
    grid = (Bp // TB,)

    # x stays f32 and unpadded in the feature dim (bf16 cast happens in-kernel); only
    # the batch dim is padded, and only when TB does not divide B.
    x_p = x.astype(jnp.float32)
    if Bp != B:
        x_p = jnp.zeros((Bp, d_in), jnp.float32).at[:B].set(x_p)

    # One-time (tiny) weight casts; weights/biases are VMEM-resident via constant maps.
    w1 = params["w1"].astype(jnp.bfloat16)                        # (d_in, 256)
    w2 = params["w2"].astype(jnp.bfloat16)                        # (256, 256)
    w3 = params["w3"].astype(jnp.bfloat16)                        # (256, 128)
    b1 = params["b1"].reshape(1, 256).astype(jnp.float32)
    b2 = params["b2"].reshape(1, 256).astype(jnp.float32)
    b3 = params["b3"].reshape(1, 128).astype(jnp.float32)
    w4_pad = jnp.zeros((8, 128), jnp.bfloat16).at[0, :].set(
        params["w4"].reshape(128).astype(jnp.bfloat16))           # row 0 = fc4 weights
    b4 = params["b4"].reshape(1, 1).astype(jnp.float32)

    def const_spec(shape):
        return pl.BlockSpec(shape, lambda i: (0, 0))              # VMEM-resident block

    flops = 2 * Bp * (d_in * 256 + 256 * 256 + 256 * 128 + 8 * 128)
    bytes_accessed = (x_p.size * 4
                      + (w1.size + w2.size + w3.size + w4_pad.size) * 2
                      + (b1.size + b2.size + b3.size + b4.size) * 4
                      + Bp * 4)                                   # lane-dense out row

    out = pl.pallas_call(
        temperature_nn_kernel,
        out_shape=jax.ShapeDtypeStruct((1, Bp), jnp.float32),
        grid=grid,
        in_specs=[
            pl.BlockSpec((TB, d_in), lambda i: (i, 0)),           # x batch tile (f32)
            const_spec((d_in, 256)), const_spec((1, 256)),        # fc1
            const_spec((256, 256)), const_spec((1, 256)),         # fc2
            const_spec((256, 128)), const_spec((1, 128)),         # fc3
            const_spec((8, 128)), const_spec((1, 1)),             # fc4 (padded) + bias
        ],
        out_specs=pl.BlockSpec((1, TB), lambda i: (0, i)),        # lane-dense output
        compiler_params=pltpu.CompilerParams(
            dimension_semantics=("parallel",)),
        cost_estimate=pl.CostEstimate(
            flops=flops, transcendentals=0, bytes_accessed=bytes_accessed),
    )(x_p, w1, b1, w2, b2, w3, b3, w4_pad, b4)

    return out[0, :B].reshape(B, 1)


def init_params(key, input_dim):
    """Deterministic synthetic init mirroring the PyTorch layer shapes.
    Weights stored transposed relative to nn.Linear: (in_features, out_features)."""
    dims = [(input_dim, 256), (256, 256), (256, 128), (128, 1)]
    params = {}
    for i, (fan_in, fan_out) in enumerate(dims, start=1):
        key, kw, kb = jax.random.split(key, 3)
        bound = 1.0 / jnp.sqrt(fan_in)
        params[f"w{i}"] = jax.random.uniform(
            kw, (fan_in, fan_out), jnp.float32, -bound, bound)
        params[f"b{i}"] = jax.random.uniform(
            kb, (1, fan_out), jnp.float32, -bound, bound)
    return params


def reference_forward(x, params):
    """Pure-JAX f32 reference for correctness checking."""
    h = _leaky_relu(x @ params["w1"] + params["b1"])
    h = _leaky_relu(h @ params["w2"] + params["b2"])
    h = _leaky_relu(h @ params["w3"] + params["b3"])
    return h @ params["w4"] + params["b4"]


if __name__ == "__main__":
    key = jax.random.PRNGKey(0)
    batch, input_dim = 8, 32

    key, kx = jax.random.split(key)
    x = jax.random.normal(kx, (batch, input_dim), dtype=jnp.float32)
    params = init_params(key, input_dim)

    out = temperature_nn_forward(x, params)
    out = jax.block_until_ready(out)

    ref = reference_forward(x, params)
    assert out.shape == (batch, 1)
    # bf16 matmul operands (f32 accumulation) -> looser tolerance vs f32 reference.
    assert jnp.allclose(out, ref, atol=5e-2, rtol=5e-2), "mismatch vs reference"

    print("KERNEL_OK")
</pallas_src>

<mosaic_0001>
module attributes {stable_mosaic.version = 11 : i64} {
  func.func @temperature_nn_kernel(%arg0: i32, %arg1: memref<16x32xf32, #tpu.memory_space<vmem>>, %arg2: memref<32x256xbf16, #tpu.memory_space<vmem>>, %arg3: memref<1x256xf32, #tpu.memory_space<vmem>>, %arg4: memref<256x256xbf16, #tpu.memory_space<vmem>>, %arg5: memref<1x256xf32, #tpu.memory_space<vmem>>, %arg6: memref<256x128xbf16, #tpu.memory_space<vmem>>, %arg7: memref<1x128xf32, #tpu.memory_space<vmem>>, %arg8: memref<8x128xbf16, #tpu.memory_space<vmem>>, %arg9: memref<1x1xf32, #tpu.memory_space<vmem>>, %arg10: memref<1x16xf32, #tpu.memory_space<vmem>>) attributes {dimension_semantics = [#tpu.dimension_semantics<parallel>], iteration_bounds = array<i64: 1>, scalar_prefetch = 0 : i64, scratch_operands = 0 : i64, tpu.core_type = #tpu.core_type<tc>, window_params = [{transform_indices = @transform_0, window_bounds = array<i64: 16, 32>}, {pipeline_mode = #tpu.pipeline_mode<synchronous>, transform_indices = @transform_1, window_bounds = array<i64: 32, 256>}, {pipeline_mode = #tpu.pipeline_mode<synchronous>, transform_indices = @transform_2, window_bounds = array<i64: 1, 256>}, {pipeline_mode = #tpu.pipeline_mode<synchronous>, transform_indices = @transform_3, window_bounds = array<i64: 256, 256>}, {pipeline_mode = #tpu.pipeline_mode<synchronous>, transform_indices = @transform_4, window_bounds = array<i64: 1, 256>}, {pipeline_mode = #tpu.pipeline_mode<synchronous>, transform_indices = @transform_5, window_bounds = array<i64: 256, 128>}, {pipeline_mode = #tpu.pipeline_mode<synchronous>, transform_indices = @transform_6, window_bounds = array<i64: 1, 128>}, {pipeline_mode = #tpu.pipeline_mode<synchronous>, transform_indices = @transform_7, window_bounds = array<i64: 8, 128>}, {pipeline_mode = #tpu.pipeline_mode<synchronous>, transform_indices = @transform_8, window_bounds = array<i64: 1, 1>}, {transform_indices = @transform_9, window_bounds = array<i64: 1, 16>}]} {
    %c0 = arith.constant 0 : index
    %c0_0 = arith.constant 0 : index
    %0 = vector.load %arg1[%c0, %c0_0] : memref<16x32xf32, #tpu.memory_space<vmem>>, vector<16x32xf32>
    %1 = arith.truncf %0 : vector<16x32xf32> to vector<16x32xbf16>
    %c0_1 = arith.constant 0 : index
    %c0_2 = arith.constant 0 : index
    %2 = vector.load %arg2[%c0_1, %c0_2] : memref<32x256xbf16, #tpu.memory_space<vmem>>, vector<32x256xbf16>
    %cst = arith.constant dense<0.000000e+00> : vector<16x256xf32>
    %3 = tpu.matmul %1, %2, %cst {dimension_numbers = #tpu.dot_dimension_numbers<[1], [0], [0], [1], [0, 0, 1, 1], [], []>} : vector<16x32xbf16>, vector<32x256xbf16>, vector<16x256xf32> -> vector<16x256xf32>
    %c0_3 = arith.constant 0 : index
    %c0_4 = arith.constant 0 : index
    %4 = vector.load %arg3[%c0_3, %c0_4] : memref<1x256xf32, #tpu.memory_space<vmem>>, vector<1x256xf32>
    %5 = vector.broadcast %4 : vector<1x256xf32> to vector<16x256xf32>
    %6 = arith.addf %3, %5 : vector<16x256xf32>
    %cst_5 = arith.constant 0.00999999977 : f32
    %7 = vector.broadcast %cst_5 : f32 to vector<16x256xf32>
    %8 = arith.mulf %7, %6 : vector<16x256xf32>
    %9 = arith.maximumf %6, %8 : vector<16x256xf32>
    %10 = arith.truncf %9 : vector<16x256xf32> to vector<16x256xbf16>
    %c0_6 = arith.constant 0 : index
    %c0_7 = arith.constant 0 : index
    %11 = vector.load %arg4[%c0_6, %c0_7] : memref<256x256xbf16, #tpu.memory_space<vmem>>, vector<256x256xbf16>
    %cst_8 = arith.constant dense<0.000000e+00> : vector<16x256xf32>
    %12 = tpu.matmul %10, %11, %cst_8 {dimension_numbers = #tpu.dot_dimension_numbers<[1], [0], [0], [1], [0, 0, 1, 1], [], []>} : vector<16x256xbf16>, vector<256x256xbf16>, vector<16x256xf32> -> vector<16x256xf32>
    %c0_9 = arith.constant 0 : index
    %c0_10 = arith.constant 0 : index
    %13 = vector.load %arg5[%c0_9, %c0_10] : memref<1x256xf32, #tpu.memory_space<vmem>>, vector<1x256xf32>
    %14 = vector.broadcast %13 : vector<1x256xf32> to vector<16x256xf32>
    %15 = arith.addf %12, %14 : vector<16x256xf32>
    %cst_11 = arith.constant 0.00999999977 : f32
    %16 = vector.broadcast %cst_11 : f32 to vector<16x256xf32>
    %17 = arith.mulf %16, %15 : vector<16x256xf32>
    %18 = arith.maximumf %15, %17 : vector<16x256xf32>
    %19 = arith.truncf %18 : vector<16x256xf32> to vector<16x256xbf16>
    %c0_12 = arith.constant 0 : index
    %c0_13 = arith.constant 0 : index
    %20 = vector.load %arg6[%c0_12, %c0_13] : memref<256x128xbf16, #tpu.memory_space<vmem>>, vector<256x128xbf16>
    %cst_14 = arith.constant dense<0.000000e+00> : vector<16x128xf32>
    %21 = tpu.matmul %19, %20, %cst_14 {dimension_numbers = #tpu.dot_dimension_numbers<[1], [0], [0], [1], [0, 0, 1, 1], [], []>} : vector<16x256xbf16>, vector<256x128xbf16>, vector<16x128xf32> -> vector<16x128xf32>
    %c0_15 = arith.constant 0 : index
    %c0_16 = arith.constant 0 : index
    %22 = vector.load %arg7[%c0_15, %c0_16] : memref<1x128xf32, #tpu.memory_space<vmem>>, vector<1x128xf32>
    %23 = vector.broadcast %22 : vector<1x128xf32> to vector<16x128xf32>
    %24 = arith.addf %21, %23 : vector<16x128xf32>
    %cst_17 = arith.constant 0.00999999977 : f32
    %25 = vector.broadcast %cst_17 : f32 to vector<16x128xf32>
    %26 = arith.mulf %25, %24 : vector<16x128xf32>
    %27 = arith.maximumf %24, %26 : vector<16x128xf32>
    %c0_18 = arith.constant 0 : index
    %c0_19 = arith.constant 0 : index
    %28 = vector.load %arg8[%c0_18, %c0_19] : memref<8x128xbf16, #tpu.memory_space<vmem>>, vector<8x128xbf16>
    %29 = arith.truncf %27 : vector<16x128xf32> to vector<16x128xbf16>
    %cst_20 = arith.constant dense<0.000000e+00> : vector<8x16xf32>
    %30 = tpu.matmul %28, %29, %cst_20 {dimension_numbers = #tpu.dot_dimension_numbers<[1], [1], [0], [0], [0, 0, 1, 0], [], []>} : vector<8x128xbf16>, vector<16x128xbf16>, vector<8x16xf32> -> vector<8x16xf32>
    %31 = vector.extract_strided_slice %30 {offsets = [0, 0], sizes = [1, 16], strides = [1, 1]} : vector<8x16xf32> to vector<1x16xf32>
    %c0_21 = arith.constant 0 : index
    %c0_22 = arith.constant 0 : index
    %32 = vector.load %arg9[%c0_21, %c0_22] : memref<1x1xf32, #tpu.memory_space<vmem>>, vector<1x1xf32>
    %33 = vector.broadcast %32 : vector<1x1xf32> to vector<1x16xf32>
    %34 = arith.addf %31, %33 : vector<1x16xf32>
    %c0_23 = arith.constant 0 : index
    %c0_24 = arith.constant 0 : index
    %35 = vector.load %arg10[%c0_23, %c0_24] : memref<1x16xf32, #tpu.memory_space<vmem>>, vector<1x16xf32>
    tpu.vector_store %arg10[%c0_23, %c0_24], %34 {strides = array<i32>} : memref<1x16xf32, #tpu.memory_space<vmem>>, vector<1x16xf32>,
    return
  }
  func.func @transform_0(%arg0: i32) -> (i32, i32) {
    %c0_i32 = arith.constant 0 : i32
    %c0_i32_0 = arith.constant 0 : i32
    return %arg0, %c0_i32 : i32, i32
  }
  func.func @transform_1(%arg0: i32) -> (i32, i32) {
    %c0_i32 = arith.constant 0 : i32
    %c0_i32_0 = arith.constant 0 : i32
    %c0_i32_1 = arith.constant 0 : i32
    return %c0_i32, %c0_i32_0 : i32, i32
  }
  func.func @transform_2(%arg0: i32) -> (i32, i32) {
    %c0_i32 = arith.constant 0 : i32
    %c0_i32_0 = arith.constant 0 : i32
    %c0_i32_1 = arith.constant 0 : i32
    return %c0_i32, %c0_i32_0 : i32, i32
  }
  func.func @transform_3(%arg0: i32) -> (i32, i32) {
    %c0_i32 = arith.constant 0 : i32
    %c0_i32_0 = arith.constant 0 : i32
    %c0_i32_1 = arith.constant 0 : i32
    return %c0_i32, %c0_i32_0 : i32, i32
  }
  func.func @transform_4(%arg0: i32) -> (i32, i32) {
    %c0_i32 = arith.constant 0 : i32
    %c0_i32_0 = arith.constant 0 : i32
    %c0_i32_1 = arith.constant 0 : i32
    return %c0_i32, %c0_i32_0 : i32, i32
  }
  func.func @transform_5(%arg0: i32) -> (i32, i32) {
    %c0_i32 = arith.constant 0 : i32
    %c0_i32_0 = arith.constant 0 : i32
    %c0_i32_1 = arith.constant 0 : i32
    return %c0_i32, %c0_i32_0 : i32, i32
  }
  func.func @transform_6(%arg0: i32) -> (i32, i32) {
    %c0_i32 = arith.constant 0 : i32
    %c0_i32_0 = arith.constant 0 : i32
    %c0_i32_1 = arith.constant 0 : i32
    return %c0_i32, %c0_i32_0 : i32, i32
  }
  func.func @transform_7(%arg0: i32) -> (i32, i32) {
    %c0_i32 = arith.constant 0 : i32
    %c0_i32_0 = arith.constant 0 : i32
    %c0_i32_1 = arith.constant 0 : i32
    return %c0_i32, %c0_i32_0 : i32, i32
  }
  func.func @transform_8(%arg0: i32) -> (i32, i32) {
    %c0_i32 = arith.constant 0 : i32
    %c0_i32_0 = arith.constant 0 : i32
    %c0_i32_1 = arith.constant 0 : i32
    return %c0_i32, %c0_i32_0 : i32, i32
  }
  func.func @transform_9(%arg0: i32) -> (i32, i32) {
    %c0_i32 = arith.constant 0 : i32
    %c0_i32_0 = arith.constant 0 : i32
    return %c0_i32, %arg0 : i32, i32
  }
}

</mosaic_0001>

<llo_original>
// kernel: tpu_custom_call.1
$region0: #{tpu_custom_call.1}
  #allocation0 [shape = 'u32[]', space=smem, size = 0x4, offset = 0x4, fixed_abs, tag = 'smem constant byte address 0x4 - core index']
  #allocation1 [shape = 'u32[144,128]{1,0:T(1,128)}', space=vmem, size = 0x12000, scoped, tag = 'internal scratch']
  #allocation2 [shape = 'f32[1,1]{1,0:T(1,128)S(1)}', space=vmem, size = 0x200, scoped, tag = 'scoped memory for tpu_custom_call.1']
  %s0 = inlined_call_operand.hbm [shape: f32[16,32], index: 0, kind: input, shape index: {}]
  %s1 = inlined_call_operand.hbm [shape: bf16[32,256], index: 1, kind: input, shape index: {}]
  %s2 = inlined_call_operand.vmem [shape: f32[1,256], index: 2, kind: input, shape index: {}]
  %s3 = inlined_call_operand.hbm [shape: bf16[256,256], index: 3, kind: input, shape index: {}]
  %s4 = inlined_call_operand.vmem [shape: f32[1,256], index: 4, kind: input, shape index: {}]
  %s5 = inlined_call_operand.hbm [shape: bf16[256,128], index: 5, kind: input, shape index: {}]
  %s6 = inlined_call_operand.vmem [shape: f32[1,128], index: 6, kind: input, shape index: {}]
  %s7 = inlined_call_operand.vmem [shape: bf16[8,128], index: 7, kind: input, shape index: {}]
  %s8 = inlined_call_operand.<no memory space> [shape: f32[1,1], index: 8, kind: input, shape index: {}]
  %s9 = inlined_call_operand.hbm [shape: f32[1,16], index: 9, kind: output, shape index: {}]
  %s10 = sld [smem:[#allocation0]]
  $region62: #{tpu_custom_call.1} parent=0
    _
  %s12 = ssub.s32 1, %s10
  %s13 = scalar_select 0, %s12, %s10
  %v14 = vstv %s8
  %15 = vst [vmem:[#allocation2] sm:$0x1] %v14
  $region1: #{tpu_custom_call.1} parent=0
    #allocation3 [shape = 'u8[8192]{0}', space=vmem, size = 0x2000, scoped, tag = 'input window, operand 0, single buffered']
    #allocation4 [shape = 's32[1]{0}', space=sflag, size = 0x4, scoped, tag = 'scoped memory for tpu_custom_call.1']
    #allocation5 [shape = 's32[1]{0}', space=sflag, size = 0x4, scoped, tag = 'scoped memory for tpu_custom_call.1']
    #allocation6 [shape = 'u8[16384]{0}', space=vmem, size = 0x4000, scoped, tag = 'input window, operand 1, single buffered']
    #allocation7 [shape = 's32[1]{0}', space=sflag, size = 0x4, scoped, tag = 'scoped memory for tpu_custom_call.1']
    #allocation8 [shape = 'u8[131072]{0}', space=vmem, size = 0x20000, scoped, tag = 'input window, operand 3, single buffered']
    #allocation9 [shape = 'u8[65536]{0}', space=vmem, size = 0x10000, scoped, tag = 'input window, operand 5, single buffered']
    #allocation10 [shape = 's32[1]{0}', space=sflag, size = 0x4, scoped, tag = 'scoped memory for tpu_custom_call.1']
    #allocation11 [shape = 'u8[512]{0}', space=vmem, size = 0x400, scoped, tag = 'output window, operand 0, single buffered']
    %16 = vsyncpa [#allocation4], 0
    %17 = vsyncpa [#allocation7], 0
    %18 = vsyncpa [#allocation10], 0
    %19 = vsyncpa [#allocation5], 0
    // Predicated region
    $region2: #{tpu_custom_call.1} parent=1 // pred_check
      _
    $region3: #{tpu_custom_call.1} parent=1 // pred_check_branch
      %21 = sbr.rel (0) target = $region5
    $region4: #{tpu_custom_call.1} parent=1 // pred_region
      %s23 = ssub.s32 256, 256
      %24 = vsyncadd [#allocation4], %s23
      %s25 = sshll.u32 [#allocation3], 4
      %s26 = int_to_ptr.vmem [resolvable:$true] %s25
      %31 = dma.hbm_to_vmem [thread:$0]  %s0, 256, %s26, [#allocation4], 128, 128, 8
    $region5: #{tpu_custom_call.1} parent=1 // pred_fallthru
      _
    // Predicated region
    $region6: #{tpu_custom_call.1} parent=1 // pred_check
      _
    $region7: #{tpu_custom_call.1} parent=1 // pred_check_branch
      %33 = sbr.rel (0) target = $region9
    $region8: #{tpu_custom_call.1} parent=1 // pred_region
      %s35 = ssub.s32 512, 512
      %36 = vsyncadd [#allocation7], %s35
      %s37 = sshll.u32 [#allocation6], 4
      %s38 = int_to_ptr.vmem [resolvable:$true] %s37
      %43 = dma.hbm_to_vmem [thread:$0]  %s1, 512, %s38, [#allocation7], 128, 128, 8
    $region9: #{tpu_custom_call.1} parent=1 // pred_fallthru
      _
    // Predicated region
    $region10: #{tpu_custom_call.1} parent=1 // pred_check
      _
    $region11: #{tpu_custom_call.1} parent=1 // pred_check_branch
      %45 = sbr.rel (0) target = $region13
    $region12: #{tpu_custom_call.1} parent=1 // pred_region
      _
    $region13: #{tpu_custom_call.1} parent=1 // pred_fallthru
      _
    // Predicated region
    $region14: #{tpu_custom_call.1} parent=1 // pred_check
      _
    $region15: #{tpu_custom_call.1} parent=1 // pred_check_branch
      %47 = sbr.rel (0) target = $region17
    $region16: #{tpu_custom_call.1} parent=1 // pred_region
      %s49 = ssub.s32 4096, 4096
      %50 = vsyncadd [#allocation7], %s49
      %s51 = sshll.u32 [#allocation8], 4
      %s52 = int_to_ptr.vmem [resolvable:$true] %s51
      %57 = dma.hbm_to_vmem [thread:$0]  %s3, 4096, %s52, [#allocation7], 128, 128, 8
    $region17: #{tpu_custom_call.1} parent=1 // pred_fallthru
      _
    // Predicated region
    $region18: #{tpu_custom_call.1} parent=1 // pred_check
      _
    $region19: #{tpu_custom_call.1} parent=1 // pred_check_branch
      %59 = sbr.rel (0) target = $region21
    $region20: #{tpu_custom_call.1} parent=1 // pred_region
      _
    $region21: #{tpu_custom_call.1} parent=1 // pred_fallthru
      _
    // Predicated region
    $region22: #{tpu_custom_call.1} parent=1 // pred_check
      _
    $region23: #{tpu_custom_call.1} parent=1 // pred_check_branch
      %61 = sbr.rel (0) target = $region25
    $region24: #{tpu_custom_call.1} parent=1 // pred_region
      %s63 = ssub.s32 2048, 2048
      %64 = vsyncadd [#allocation10], %s63
      %s65 = sshll.u32 [#allocation9], 4
      %s66 = int_to_ptr.vmem [resolvable:$true] %s65
      %71 = dma.hbm_to_vmem [thread:$0]  %s5, 2048, %s66, [#allocation10], 64, 64, 4
    $region25: #{tpu_custom_call.1} parent=1 // pred_fallthru
      _
    // Predicated region
    $region26: #{tpu_custom_call.1} parent=1 // pred_check
      _
    $region27: #{tpu_custom_call.1} parent=1 // pred_check_branch
      %73 = sbr.rel (0) target = $region29
    $region28: #{tpu_custom_call.1} parent=1 // pred_region
      _
    $region29: #{tpu_custom_call.1} parent=1 // pred_fallthru
      _
    // Predicated region
    $region30: #{tpu_custom_call.1} parent=1 // pred_check
      _
    $region31: #{tpu_custom_call.1} parent=1 // pred_check_branch
      %75 = sbr.rel (0) target = $region33
    $region32: #{tpu_custom_call.1} parent=1 // pred_region
      _
    $region33: #{tpu_custom_call.1} parent=1 // pred_fallthru
      _
    // Predicated region
    $region34: #{tpu_custom_call.1} parent=1 // pred_check
      _
    $region35: #{tpu_custom_call.1} parent=1 // pred_check_branch
      %77 = sbr.rel (0) target = $region37
    $region36: #{tpu_custom_call.1} parent=1 // pred_region
      _
    $region37: #{tpu_custom_call.1} parent=1 // pred_fallthru
      _
    // Predicated region
    $region38: #{tpu_custom_call.1} parent=1 // pred_check
      _
    $region39: #{tpu_custom_call.1} parent=1 // pred_check_branch
      %79 = sbr.rel (0) target = $region41
    $region40: #{tpu_custom_call.1} parent=1 // pred_region
      %80 = dma.done [#allocation4], 256
    $region41: #{tpu_custom_call.1} parent=1 // pred_fallthru
      _
    // Predicated region
    $region42: #{tpu_custom_call.1} parent=1 // pred_check
      _
    $region43: #{tpu_custom_call.1} parent=1 // pred_check_branch
      %82 = sbr.rel (0) target = $region45
    $region44: #{tpu_custom_call.1} parent=1 // pred_region
      %83 = dma.done [#allocation7], 512
    $region45: #{tpu_custom_call.1} parent=1 // pred_fallthru
      _
    // Predicated region
    $region46: #{tpu_custom_call.1} parent=1 // pred_check
      _
    $region47: #{tpu_custom_call.1} parent=1 // pred_check_branch
      %85 = sbr.rel (0) target = $region49
    $region48: #{tpu_custom_call.1} parent=1 // pred_region
      %86 = dma.done [#allocation7], 4096
    $region49: #{tpu_custom_call.1} parent=1 // pred_fallthru
      _
    // Predicated region
    $region50: #{tpu_custom_call.1} parent=1 // pred_check
      _
    $region51: #{tpu_custom_call.1} parent=1 // pred_check_branch
      %88 = sbr.rel (0) target = $region53
    $region52: #{tpu_custom_call.1} parent=1 // pred_region
      %89 = dma.done [#allocation10], 2048
    $region53: #{tpu_custom_call.1} parent=1 // pred_fallthru
      _
    %v91 = vld [vmem:[#allocation3] sm:$0xff]
    %v92 = vld [vmem:[#allocation3 + $0x8] sm:$0xff]
    %v93 = vpack.c.bf16 %v92, %v91
    %v94 = vld [vmem:[#allocation6] sm:$0xff]
    %v95 = vld [vmem:[#allocation6 + $0x8] sm:$0xff]
    %v96 = vld [vmem:[#allocation6 + $0x10] sm:$0xff]
    %v97 = vld [vmem:[#allocation6 + $0x18] sm:$0xff]
    %v98 = vld [vmem:[%s2] sm:$0x3]
    %v100 = vlaneseq
    %v101 = vshrl.u32 %v100, 7
    %v102 = vsub.s32 0, %v101
    %v103 = vrot.slane %v98, %v102
    %v104 = vlaneseq
    %v105 = vshrl.u32 %v104, 7
    %v106 = vsub.s32 1, %v105
    %v107 = vrot.slane %v98, %v106
    %v114 = vunpack.c.l.b16 %v94
    %v115 = vunpack.c.h.b16 %v94
    %v116 = vunpack.c.l.b16 %v95
    %v117 = vunpack.c.h.b16 %v95
    %v118 = vunpack.c.l.b16 %v96
    %v119 = vunpack.c.h.b16 %v96
    %v120 = vunpack.c.l.b16 %v97
    %v121 = vunpack.c.h.b16 %v97
    %v122 = vpack.c.b16 %v116, %v114
    %v123 = vpack.c.b16 %v117, %v115
    %v124 = vpack.c.b16 %v120, %v118
    %v125 = vpack.c.b16 %v121, %v119
    %vm130 = vcmask 261120
    %v132 = vsel %vm130, %v93, 0
    %134 = vmatprep.subr.bf16.mxu0 %v123
    %135 = vmatpush1.bf16.msra.mxu0 %v122
    %136 = vmatprep.subr.bf16.mxu0 %v125
    %137 = vmatpush1.bf16.msra.mxu0 %v124
    %138 = vmatprep.subr.bf16.mxu0 0
    %139 = vmatpush1.bf16.msra.mxu0 0
    %140 = vmatprep.subr.bf16.mxu0 0
    %141 = vmatpush1.bf16.msra.mxu0 0
    %142 = vmatprep.subr.bf16.mxu0 0
    %143 = vmatpush1.bf16.msra.mxu0 0
    %144 = vmatprep.subr.bf16.mxu0 0
    %145 = vmatpush1.bf16.msra.mxu0 0
    %146 = vmatprep.subr.bf16.mxu0 0
    %147 = vmatpush1.bf16.msra.mxu0 0
    %148 = vmatprep.subr.bf16.mxu0 0
    %149 = vmatpush1.bf16.msra.mxu0 0
    %150 = vmatprep.subr.bf16.mxu0 0
    %151 = vmatpush1.bf16.msra.mxu0 0
    %152 = vmatprep.subr.bf16.mxu0 0
    %153 = vmatpush1.bf16.msra.mxu0 0
    %154 = vmatprep.subr.bf16.mxu0 0
    %155 = vmatpush1.bf16.msra.mxu0 0
    %156 = vmatprep.subr.bf16.mxu0 0
    %157 = vmatpush1.bf16.msra.mxu0 0
    %158 = vmatprep.subr.bf16.mxu0 0
    %159 = vmatpush1.bf16.msra.mxu0 0
    %160 = vmatprep.subr.bf16.mxu0 0
    %161 = vmatpush1.bf16.msra.mxu0 0
    %162 = vmatprep.subr.bf16.mxu0 0
    %163 = vmatpush1.bf16.msra.mxu0 0
    %164 = vmatprep.subr.bf16.mxu0 0
    %165 = vmatpush1.bf16.msra.mxu0 0
    %166 = vmatprep.mubr.bf16.mxu0 0
    %167 = vmatmul.mubr.bf16.gmra.mrb[0].mxu0 %v132
    %v168 = vpop.f32.mrb[0].mxu0
    %v169 = vadd.f32 %v103, %v168
    %v170 = vpop.f32.mrb[0].mxu0
    %v171 = vadd.f32 %v107, %v170
    %v172 = vpop.f32.mrb[0].mxu0
    %v173 = vadd.f32 %v103, %v172
    %v174 = vpop.f32.mrb[0].mxu0
    %v175 = vadd.f32 %v107, %v174
    %176 = vdwg.mxu0
    %v177 = vmul.f32 %v169, 0.01
    %v178 = vmul.f32 %v171, 0.01
    %v179 = vmul.f32 %v173, 0.01
    %v180 = vmul.f32 %v175, 0.01
    %v181 = vmax.f32 %v169, %v177
    %v182 = vmax.f32 %v171, %v178
    %v183 = vmax.f32 %v173, %v179
    %v184 = vmax.f32 %v175, %v180
    %v185 = vpack.c.bf16 %v183, %v181
    %v186 = vpack.c.bf16 %v184, %v182
    %v187 = vld [vmem:[#allocation8] sm:$0xff]
    %v188 = vld [vmem:[#allocation8 + $0x8] sm:$0xff]
    %v189 = vld [vmem:[#allocation8 + $0x10] sm:$0xff]
    %v190 = vld [vmem:[#allocation8 + $0x18] sm:$0xff]
    %v191 = vld [vmem:[#allocation8 + $0x20] sm:$0xff]
    %v192 = vld [vmem:[#allocation8 + $0x28] sm:$0xff]
    %v193 = vld [vmem:[#allocation8 + $0x30] sm:$0xff]
    %v194 = vld [vmem:[#allocation8 + $0x38] sm:$0xff]
    %v195 = vld [vmem:[#allocation8 + $0x40] sm:$0xff]
    %v196 = vld [vmem:[#allocation8 + $0x48] sm:$0xff]
    %v197 = vld [vmem:[#allocation8 + $0x50] sm:$0xff]
    %v198 = vld [vmem:[#allocation8 + $0x58] sm:$0xff]
    %v199 = vld [vmem:[#allocation8 + $0x60] sm:$0xff]
    %v200 = vld [vmem:[#allocation8 + $0x68] sm:$0xff]
    %v201 = vld [vmem:[#allocation8 + $0x70] sm:$0xff]
    %v202 = vld [vmem:[#allocation8 + $0x78] sm:$0xff]
    %v203 = vld [vmem:[#allocation8 + $0x80] sm:$0xff]
    %v204 = vld [vmem:[#allocation8 + $0x88] sm:$0xff]
    %v205 = vld [vmem:[#allocation8 + $0x90] sm:$0xff]
    %v206 = vld [vmem:[#allocation8 + $0x98] sm:$0xff]
    %v207 = vld [vmem:[#allocation8 + $0xa0] sm:$0xff]
    %v208 = vld [vmem:[#allocation8 + $0xa8] sm:$0xff]
    %v209 = vld [vmem:[#allocation8 + $0xb0] sm:$0xff]
    %v210 = vld [vmem:[#allocation8 + $0xb8] sm:$0xff]
    %v211 = vld [vmem:[#allocation8 + $0xc0] sm:$0xff]
    %v212 = vld [vmem:[#allocation8 + $0xc8] sm:$0xff]
    %v213 = vld [vmem:[#allocation8 + $0xd0] sm:$0xff]
    %v214 = vld [vmem:[#allocation8 + $0xd8] sm:$0xff]
    %v215 = vld [vmem:[#allocation8 + $0xe0] sm:$0xff]
    %v216 = vld [vmem:[#allocation8 + $0xe8] sm:$0xff]
    %v217 = vld [vmem:[#allocation8 + $0xf0] sm:$0xff]
    %v218 = vld [vmem:[#allocation8 + $0xf8] sm:$0xff]
    %v219 = vld [vmem:[%s4] sm:$0x3]
    %v221 = vlaneseq
    %v222 = vshrl.u32 %v221, 7
    %v223 = vsub.s32 0, %v222
    %v224 = vrot.slane %v219, %v223
    %v225 = vlaneseq
    %v226 = vshrl.u32 %v225, 7
    %v227 = vsub.s32 1, %v226
    %v228 = vrot.slane %v219, %v227
    %v263 = vunpack.c.l.b16 %v187
    %v264 = vunpack.c.h.b16 %v187
    %v265 = vunpack.c.l.b16 %v188
    %v266 = vunpack.c.h.b16 %v188
    %v267 = vunpack.c.l.b16 %v189
    %v268 = vunpack.c.h.b16 %v189
    %v269 = vunpack.c.l.b16 %v190
    %v270 = vunpack.c.h.b16 %v190
    %v271 = vunpack.c.l.b16 %v191
    %v272 = vunpack.c.h.b16 %v191
    %v273 = vunpack.c.l.b16 %v192
    %v274 = vunpack.c.h.b16 %v192
    %v275 = vunpack.c.l.b16 %v193
    %v276 = vunpack.c.h.b16 %v193
    %v277 = vunpack.c.l.b16 %v194
    %v278 = vunpack.c.h.b16 %v194
    %v279 = vunpack.c.l.b16 %v195
    %v280 = vunpack.c.h.b16 %v195
    %v281 = vunpack.c.l.b16 %v196
    %v282 = vunpack.c.h.b16 %v196
    %v283 = vunpack.c.l.b16 %v197
    %v284 = vunpack.c.h.b16 %v197
    %v285 = vunpack.c.l.b16 %v198
    %v286 = vunpack.c.h.b16 %v198
    %v287 = vunpack.c.l.b16 %v199
    %v288 = vunpack.c.h.b16 %v199
    %v289 = vunpack.c.l.b16 %v200
    %v290 = vunpack.c.h.b16 %v200
    %v291 = vunpack.c.l.b16 %v201
    %v292 = vunpack.c.h.b16 %v201
    %v293 = vunpack.c.l.b16 %v202
    %v294 = vunpack.c.h.b16 %v202
    %v295 = vunpack.c.l.b16 %v203
    %v296 = vunpack.c.h.b16 %v203
    %v297 = vunpack.c.l.b16 %v204
    %v298 = vunpack.c.h.b16 %v204
    %v299 = vunpack.c.l.b16 %v205
    %v300 = vunpack.c.h.b16 %v205
    %v301 = vunpack.c.l.b16 %v206
    %v302 = vunpack.c.h.b16 %v206
    %v303 = vunpack.c.l.b16 %v207
    %v304 = vunpack.c.h.b16 %v207
    %v305 = vunpack.c.l.b16 %v208
    %v306 = vunpack.c.h.b16 %v208
    %v307 = vunpack.c.l.b16 %v209
    %v308 = vunpack.c.h.b16 %v209
    %v309 = vunpack.c.l.b16 %v210
    %v310 = vunpack.c.h.b16 %v210
    %v311 = vunpack.c.l.b16 %v211
    %v312 = vunpack.c.h.b16 %v211
    %v313 = vunpack.c.l.b16 %v212
    %v314 = vunpack.c.h.b16 %v212
    %v315 = vunpack.c.l.b16 %v213
    %v316 = vunpack.c.h.b16 %v213
    %v317 = vunpack.c.l.b16 %v214
    %v318 = vunpack.c.h.b16 %v214
    %v319 = vunpack.c.l.b16 %v215
    %v320 = vunpack.c.h.b16 %v215
    %v321 = vunpack.c.l.b16 %v216
    %v322 = vunpack.c.h.b16 %v216
    %v323 = vunpack.c.l.b16 %v217
    %v324 = vunpack.c.h.b16 %v217
    %v325 = vunpack.c.l.b16 %v218
    %v326 = vunpack.c.h.b16 %v218
    %v327 = vpack.c.b16 %v265, %v263
    %v328 = vpack.c.b16 %v266, %v264
    %v329 = vpack.c.b16 %v269, %v267
    %v330 = vpack.c.b16 %v270, %v268
    %v331 = vpack.c.b16 %v273, %v271
    %v332 = vpack.c.b16 %v274, %v272
    %v333 = vpack.c.b16 %v277, %v275
    %v334 = vpack.c.b16 %v278, %v276
    %v335 = vpack.c.b16 %v281, %v279
    %v336 = vpack.c.b16 %v282, %v280
    %v337 = vpack.c.b16 %v285, %v283
    %v338 = vpack.c.b16 %v286, %v284
    %v339 = vpack.c.b16 %v289, %v287
    %v340 = vpack.c.b16 %v290, %v288
    %v341 = vpack.c.b16 %v293, %v291
    %v342 = vpack.c.b16 %v294, %v292
    %v343 = vpack.c.b16 %v297, %v295
    %v344 = vpack.c.b16 %v298, %v296
    %v345 = vpack.c.b16 %v301, %v299
    %v346 = vpack.c.b16 %v302, %v300
    %v347 = vpack.c.b16 %v305, %v303
    %v348 = vpack.c.b16 %v306, %v304
    %v349 = vpack.c.b16 %v309, %v307
    %v350 = vpack.c.b16 %v310, %v308
    %v351 = vpack.c.b16 %v313, %v311
    %v352 = vpack.c.b16 %v314, %v312
    %v353 = vpack.c.b16 %v317, %v315
    %v354 = vpack.c.b16 %v318, %v316
    %v355 = vpack.c.b16 %v321, %v319
    %v356 = vpack.c.b16 %v322, %v320
    %v357 = vpack.c.b16 %v325, %v323
    %v358 = vpack.c.b16 %v326, %v324
    %391 = vmatprep.subr.bf16.mxu0 %v328
    %392 = vmatpush1.bf16.msra.mxu0 %v327
    %393 = vmatprep.subr.bf16.mxu0 %v330
    %394 = vmatpush1.bf16.msra.mxu0 %v329
    %395 = vmatprep.subr.bf16.mxu0 %v332
    %396 = vmatpush1.bf16.msra.mxu0 %v331
    %397 = vmatprep.subr.bf16.mxu0 %v334
    %398 = vmatpush1.bf16.msra.mxu0 %v333
    %399 = vmatprep.subr.bf16.mxu0 %v336
    %400 = vmatpush1.bf16.msra.mxu0 %v335
    %401 = vmatprep.subr.bf16.mxu0 %v338
    %402 = vmatpush1.bf16.msra.mxu0 %v337
    %403 = vmatprep.subr.bf16.mxu0 %v340
    %404 = vmatpush1.bf16.msra.mxu0 %v339
    %405 = vmatprep.subr.bf16.mxu0 %v342
    %406 = vmatpush1.bf16.msra.mxu0 %v341
    %407 = vmatprep.subr.bf16.mxu0 %v344
    %408 = vmatpush1.bf16.msra.mxu0 %v343
    %409 = vmatprep.subr.bf16.mxu0 %v346
    %410 = vmatpush1.bf16.msra.mxu0 %v345
    %411 = vmatprep.subr.bf16.mxu0 %v348
    %412 = vmatpush1.bf16.msra.mxu0 %v347
    %413 = vmatprep.subr.bf16.mxu0 %v350
    %414 = vmatpush1.bf16.msra.mxu0 %v349
    %415 = vmatprep.subr.bf16.mxu0 %v352
    %416 = vmatpush1.bf16.msra.mxu0 %v351
    %417 = vmatprep.subr.bf16.mxu0 %v354
    %418 = vmatpush1.bf16.msra.mxu0 %v353
    %419 = vmatprep.subr.bf16.mxu0 %v356
    %420 = vmatpush1.bf16.msra.mxu0 %v355
    %421 = vmatprep.subr.bf16.mxu0 %v358
    %422 = vmatpush1.bf16.msra.mxu0 %v357
    %423 = vmatprep.mubr.bf16.mxu0 %v186
    %424 = vmatmul.mubr.bf16.gmra.mrb[0].mxu0 %v185
    %v425 = vpop.f32.mrb[0].mxu0
    %v426 = vadd.f32 %v224, %v425
    %v427 = vpop.f32.mrb[0].mxu0
    %v428 = vadd.f32 %v228, %v427
    %v429 = vpop.f32.mrb[0].mxu0
    %v430 = vadd.f32 %v224, %v429
    %v431 = vpop.f32.mrb[0].mxu0
    %v432 = vadd.f32 %v228, %v431
    %433 = vdwg.mxu0
    %v434 = vmul.f32 %v426, 0.01
    %v435 = vmul.f32 %v428, 0.01
    %v436 = vmul.f32 %v430, 0.01
    %v437 = vmul.f32 %v432, 0.01
    %v438 = vmax.f32 %v426, %v434
    %v439 = vmax.f32 %v428, %v435
    %v440 = vmax.f32 %v430, %v436
    %v441 = vmax.f32 %v432, %v437
    %v442 = vpack.c.bf16 %v440, %v438
    %v443 = vpack.c.bf16 %v441, %v439
    %v444 = vld [vmem:[#allocation9] sm:$0xf]
    %v445 = vld [vmem:[#allocation9 + $0x4] sm:$0xf]
    %v446 = vld [vmem:[#allocation9 + $0x8] sm:$0xf]
    %v447 = vld [vmem:[#allocation9 + $0xc] sm:$0xf]
    %v448 = vld [vmem:[#allocation9 + $0x10] sm:$0xf]
    %v449 = vld [vmem:[#allocation9 + $0x14] sm:$0xf]
    %v450 = vld [vmem:[#allocation9 + $0x18] sm:$0xf]
    %v451 = vld [vmem:[#allocation9 + $0x1c] sm:$0xf]
    %v452 = vld [vmem:[#allocation9 + $0x20] sm:$0xf]
    %v453 = vld [vmem:[#allocation9 + $0x24] sm:$0xf]
    %v454 = vld [vmem:[#allocation9 + $0x28] sm:$0xf]
    %v455 = vld [vmem:[#allocation9 + $0x2c] sm:$0xf]
    %v456 = vld [vmem:[#allocation9 + $0x30] sm:$0xf]
    %v457 = vld [vmem:[#allocation9 + $0x34] sm:$0xf]
    %v458 = vld [vmem:[#allocation9 + $0x38] sm:$0xf]
    %v459 = vld [vmem:[#allocation9 + $0x3c] sm:$0xf]
    %v460 = vld [vmem:[#allocation9 + $0x40] sm:$0xf]
    %v461 = vld [vmem:[#allocation9 + $0x44] sm:$0xf]
    %v462 = vld [vmem:[#allocation9 + $0x48] sm:$0xf]
    %v463 = vld [vmem:[#allocation9 + $0x4c] sm:$0xf]
    %v464 = vld [vmem:[#allocation9 + $0x50] sm:$0xf]
    %v465 = vld [vmem:[#allocation9 + $0x54] sm:$0xf]
    %v466 = vld [vmem:[#allocation9 + $0x58] sm:$0xf]
    %v467 = vld [vmem:[#allocation9 + $0x5c] sm:$0xf]
    %v468 = vld [vmem:[#allocation9 + $0x60] sm:$0xf]
    %v469 = vld [vmem:[#allocation9 + $0x64] sm:$0xf]
    %v470 = vld [vmem:[#allocation9 + $0x68] sm:$0xf]
    %v471 = vld [vmem:[#allocation9 + $0x6c] sm:$0xf]
    %v472 = vld [vmem:[#allocation9 + $0x70] sm:$0xf]
    %v473 = vld [vmem:[#allocation9 + $0x74] sm:$0xf]
    %v474 = vld [vmem:[#allocation9 + $0x78] sm:$0xf]
    %v475 = vld [vmem:[#allocation9 + $0x7c] sm:$0xf]
    %v476 = vld [vmem:[%s6] sm:$0x1]
    %v478 = vlaneseq
    %v479 = vshrl.u32 %v478, 7
    %v480 = vsub.s32 0, %v479
    %v481 = vrot.slane %v476, %v480
    %v515 = vunpack.c.l.b16 %v444
    %v516 = vunpack.c.l.b16 %v445
    %v517 = vunpack.c.l.b16 %v446
    %v518 = vunpack.c.l.b16 %v447
    %v519 = vunpack.c.l.b16 %v448
    %v520 = vunpack.c.l.b16 %v449
    %v521 = vunpack.c.l.b16 %v450
    %v522 = vunpack.c.l.b16 %v451
    %v523 = vunpack.c.l.b16 %v452
    %v524 = vunpack.c.l.b16 %v453
    %v525 = vunpack.c.l.b16 %v454
    %v526 = vunpack.c.l.b16 %v455
    %v527 = vunpack.c.l.b16 %v456
    %v528 = vunpack.c.l.b16 %v457
    %v529 = vunpack.c.l.b16 %v458
    %v530 = vunpack.c.l.b16 %v459
    %v531 = vunpack.c.l.b16 %v460
    %v532 = vunpack.c.l.b16 %v461
    %v533 = vunpack.c.l.b16 %v462
    %v534 = vunpack.c.l.b16 %v463
    %v535 = vunpack.c.l.b16 %v464
    %v536 = vunpack.c.l.b16 %v465
    %v537 = vunpack.c.l.b16 %v466
    %v538 = vunpack.c.l.b16 %v467
    %v539 = vunpack.c.l.b16 %v468
    %v540 = vunpack.c.l.b16 %v469
    %v541 = vunpack.c.l.b16 %v470
    %v542 = vunpack.c.l.b16 %v471
    %v543 = vunpack.c.l.b16 %v472
    %v544 = vunpack.c.l.b16 %v473
    %v545 = vunpack.c.l.b16 %v474
    %v546 = vunpack.c.l.b16 %v475
    %v547 = vpack.c.b16 %v516, %v515
    %v548 = vpack.c.b16 %v518, %v517
    %v549 = vpack.c.b16 %v520, %v519
    %v550 = vpack.c.b16 %v522, %v521
    %v551 = vpack.c.b16 %v524, %v523
    %v552 = vpack.c.b16 %v526, %v525
    %v553 = vpack.c.b16 %v528, %v527
    %v554 = vpack.c.b16 %v530, %v529
    %v555 = vpack.c.b16 %v532, %v531
    %v556 = vpack.c.b16 %v534, %v533
    %v557 = vpack.c.b16 %v536, %v535
    %v558 = vpack.c.b16 %v538, %v537
    %v559 = vpack.c.b16 %v540, %v539
    %v560 = vpack.c.b16 %v542, %v541
    %v561 = vpack.c.b16 %v544, %v543
    %v562 = vpack.c.b16 %v546, %v545
    %579 = vmatprep.subr.bf16.mxu0 0
    %580 = vmatpush1.bf16.msra.mxu0 %v547
    %581 = vmatprep.subr.bf16.mxu0 0
    %582 = vmatpush1.bf16.msra.mxu0 %v548
    %583 = vmatprep.subr.bf16.mxu0 0
    %584 = vmatpush1.bf16.msra.mxu0 %v549
    %585 = vmatprep.subr.bf16.mxu0 0
    %586 = vmatpush1.bf16.msra.mxu0 %v550
    %587 = vmatprep.subr.bf16.mxu0 0
    %588 = vmatpush1.bf16.msra.mxu0 %v551
    %589 = vmatprep.subr.bf16.mxu0 0
    %590 = vmatpush1.bf16.msra.mxu0 %v552
    %591 = vmatprep.subr.bf16.mxu0 0
    %592 = vmatpush1.bf16.msra.mxu0 %v553
    %593 = vmatprep.subr.bf16.mxu0 0
    %594 = vmatpush1.bf16.msra.mxu0 %v554
    %595 = vmatprep.subr.bf16.mxu0 0
    %596 = vmatpush1.bf16.msra.mxu0 %v555
    %597 = vmatprep.subr.bf16.mxu0 0
    %598 = vmatpush1.bf16.msra.mxu0 %v556
    %599 = vmatprep.subr.bf16.mxu0 0
    %600 = vmatpush1.bf16.msra.mxu0 %v557
    %601 = vmatprep.subr.bf16.mxu0 0
    %602 = vmatpush1.bf16.msra.mxu0 %v558
    %603 = vmatprep.subr.bf16.mxu0 0
    %604 = vmatpush1.bf16.msra.mxu0 %v559
    %605 = vmatprep.subr.bf16.mxu0 0
    %606 = vmatpush1.bf16.msra.mxu0 %v560
    %607 = vmatprep.subr.bf16.mxu0 0
    %608 = vmatpush1.bf16.msra.mxu0 %v561
    %609 = vmatprep.subr.bf16.mxu0 0
    %610 = vmatpush1.bf16.msra.mxu0 %v562
    %611 = vmatprep.mubr.bf16.mxu0 %v443
    %612 = vmatmul.mubr.bf16.gmra.mrb[0].mxu0 %v442
    %v613 = vpop.f32.mrb[0].mxu0
    %v614 = vadd.f32 %v481, %v613
    %v615 = vpop.f32.mrb[0].mxu0
    %v616 = vpop.f32.mrb[0].mxu0
    %v617 = vadd.f32 %v481, %v616
    %v618 = vpop.f32.mrb[0].mxu0
    %619 = vdwg.mxu0
    %v620 = vmul.f32 %v614, 0.01
    %v621 = vmul.f32 %v617, 0.01
    %v622 = vmax.f32 %v614, %v620
    %v623 = vmax.f32 %v617, %v621
    %v624 = vld [vmem:[%s7] sm:$0xf]
    %v625 = vpack.c.bf16 %v623, %v622
    %626 = vmatprep.subr.bf16.mxu0 0
    %627 = vmatpush1.bf16.xpose.msra.mxu0 %v625
    %628 = vmatprep.subr.bf16.mxu0 0
    %629 = vmatpush1.bf16.xpose.msra.mxu0 0
    %630 = vmatprep.subr.bf16.mxu0 0
    %631 = vmatpush1.bf16.xpose.msra.mxu0 0
    %632 = vmatprep.subr.bf16.mxu0 0
    %633 = vmatpush1.bf16.xpose.msra.mxu0 0
    %634 = vmatprep.subr.bf16.mxu0 0
    %635 = vmatpush1.bf16.xpose.msra.mxu0 0
    %636 = vmatprep.subr.bf16.mxu0 0
    %637 = vmatpush1.bf16.xpose.msra.mxu0 0
    %638 = vmatprep.subr.bf16.mxu0 0
    %639 = vmatpush1.bf16.xpose.msra.mxu0 0
    %640 = vmatprep.subr.bf16.mxu0 0
    %641 = vmatpush1.bf16.xpose.msra.mxu0 0
    %642 = vmatprep.subr.bf16.mxu0 0
    %643 = vmatpush1.bf16.xpose.msra.mxu0 0
    %644 = vmatprep.subr.bf16.mxu0 0
    %645 = vmatpush1.bf16.xpose.msra.mxu0 0
    %646 = vmatprep.subr.bf16.mxu0 0
    %647 = vmatpush1.bf16.xpose.msra.mxu0 0
    %648 = vmatprep.subr.bf16.mxu0 0
    %649 = vmatpush1.bf16.xpose.msra.mxu0 0
    %650 = vmatprep.subr.bf16.mxu0 0
    %651 = vmatpush1.bf16.xpose.msra.mxu0 0
    %652 = vmatprep.subr.bf16.mxu0 0
    %653 = vmatpush1.bf16.xpose.msra.mxu0 0
    %654 = vmatprep.subr.bf16.mxu0 0
    %655 = vmatpush1.bf16.xpose.msra.mxu0 0
    %656 = vmatprep.subr.bf16.mxu0 0
    %657 = vmatpush1.bf16.xpose.msra.mxu0 0
    %658 = vmatprep.mubr.bf16.mxu0 0
    %659 = vmatmul.mubr.bf16.gmra.mrb[0].mxu0 %v624
    %v660 = vpop.f32.mrb[0].mxu0
    %v661 = vadd.f32 0.0, %v660
    %v662 = vpop.f32.mrb[0].mxu0
    %v663 = vpop.f32.mrb[0].mxu0
    %v664 = vpop.f32.mrb[0].mxu0
    %665 = vdwg.mxu0
    %v666 = vld [vmem:[#allocation2] sm:$0x1]
    %668 = vset.pattern.permute.xlu0 0
    %669 = vperm.xlu0 %668, %v666
    %v670 = vpop.permute.xlu0 %669
    %v672 = vlaneseq
    %v673 = vshrl.u32 %v672, 7
    %v674 = vsub.s32 0, %v673
    %v675 = vrot.slane %v670, %v674
    %v676 = vadd.f32 %v661, %v675
    %vm677 = vcmask 122880
    %678 = vst.msk [vmem:[#allocation11] sm:$0x1] %vm677, %v676
    // Predicated region
    $region54: #{tpu_custom_call.1} parent=1 // pred_check
      _
    $region55: #{tpu_custom_call.1} parent=1 // pred_check_branch
      %680 = sbr.rel (0) target = $region57
    $region56: #{tpu_custom_call.1} parent=1 // pred_region
      %s682 = ssub.s32 16, 16
      %683 = vsyncadd [#allocation5], %s682
      %s685 = sshll.u32 [#allocation11], 4
      %s686 = int_to_ptr.vmem [resolvable:$true] %s685
      %688 = dma.vmem_to_hbm [thread:$0]  %s686, 16, %s9, [#allocation5]
    $region57: #{tpu_custom_call.1} parent=1 // pred_fallthru
      _
    // Predicated region
    $region58: #{tpu_custom_call.1} parent=1 // pred_check
      _
    $region59: #{tpu_custom_call.1} parent=1 // pred_check_branch
      %690 = sbr.rel (0) target = $region61
    $region60: #{tpu_custom_call.1} parent=1 // pred_region
      %691 = dma.done [#allocation5], 16
    $region61: #{tpu_custom_call.1} parent=1 // pred_fallthru
      _
    %692 = vsyncpa [#allocation4], 1
    %693 = vsyncpa [#allocation7], 1
    %694 = vsyncpa [#allocation10], 1
    %695 = vsyncpa [#allocation5], 1

</llo_original>
